<compile_context>
chip_gen: v7x
topology: tpu7x:2x2x1
jax: 0.10.0
libtpu: 0.0.40
codegen_flags: <defaults>
</compile_context>

<pallas_src>
import jax
import jax.numpy as jnp
from jax.experimental import pallas as pl
from jax.experimental.pallas import tpu as pltpu


def ssa_kernel(x_ref, wi_ref, wkv_ref, bkv_ref, wo_ref, bo_ref, o_ref):
    tb, n, d = x_ref.shape

    # (TB, n, d) -> (TB*n, d): lane dim (d) untouched, layout-preserving.
    x = x_ref[...].reshape(tb * n, d)                       # bf16
    x_f32 = x.astype(jnp.float32)

    # fc_i on the VPU/XLU: i = x @ wi  -> (TB*n, 1).
    # (fc_i's scalar bias is omitted: it is uniform along the softmax axis and
    #  cancels in softmax, so the forward output is unchanged.)
    i = jnp.sum(x_f32 * wi_ref[...], axis=-1, keepdims=True)

    # Fused fc_k | fc_v on the MXU: one (TB*n, d) x (d, 2d) pass, f32 accum.
    kv = jnp.dot(x, wkv_ref[...], preferred_element_type=jnp.float32)
    kv = kv + bkv_ref[...]
    k = kv[:, :d].reshape(tb, n, d)
    vp = kv[:, d:].reshape(tb, n, d)

    # softmax over the sequence axis (PyTorch dim=1), in f32.
    i3 = i.reshape(tb, n, 1)
    m = jnp.max(i3, axis=1, keepdims=True)
    e = jnp.exp(i3 - m)
    w = e * pl.reciprocal(jnp.sum(e, axis=1, keepdims=True), approx=True)

    # context vector + value modulation.
    ctx = jnp.sum(w * k, axis=1, keepdims=True)             # (TB, 1, d)
    v = (vp * ctx).reshape(tb * n, d)

    # fc_o on the MXU.
    out = jnp.dot(v.astype(wo_ref.dtype), wo_ref[...],
                  preferred_element_type=jnp.float32) + bo_ref[...]
    o_ref[...] = out.reshape(tb, n, d).astype(o_ref.dtype)


def ssa_forward(x, params, *, block_b=None):
    """x: (b, n, d) float32.  params: dict of pre-transposed weights/biases."""
    b, n, d = x.shape
    out_dtype = x.dtype

    if block_b is None:
        # Aim for ~1024 rows (TB*n) per grid step to amortize per-step overhead
        # and fill MXU rows; capped by the batch size.
        block_b = max(1, min(b, max(1, 1024 // max(n, 1))))

    # Pad batch to a multiple of block_b (padded rows are harmless, sliced off).
    grid_b = pl.cdiv(b, block_b)
    bp = grid_b * block_b
    if bp != b:
        x = jnp.pad(x, ((0, bp - b), (0, 0), (0, 0)))

    # Pack / cast weights once at the call boundary.
    mm_dtype = jnp.bfloat16
    wi_row = params["wi"].reshape(1, d).astype(jnp.float32)            # VPU path
    wkv = jnp.concatenate([params["wk"], params["wv"]], axis=1).astype(mm_dtype)
    bkv = jnp.concatenate([params["bk"], params["bv"]], axis=1).astype(jnp.float32)
    wo = params["wo"].astype(mm_dtype)
    bo = params["bo"].astype(jnp.float32)
    x_in = x.astype(mm_dtype)

    const = lambda i: (0, 0)   # weights: same block every step (fetched once)
    grid_spec = pltpu.PrefetchScalarGridSpec(
        num_scalar_prefetch=0,
        grid=(grid_b,),
        in_specs=[
            pl.BlockSpec((block_b, n, d), lambda i: (i, 0, 0)),  # x block
            pl.BlockSpec((1, d), const),          # wi (as a row)
            pl.BlockSpec((d, 2 * d), const),      # [wk | wv] fused
            pl.BlockSpec((1, 2 * d), const),      # [bk | bv] fused
            pl.BlockSpec((d, d), const),          # wo
            pl.BlockSpec((1, d), const),          # bo
        ],
        out_specs=pl.BlockSpec((block_b, n, d), lambda i: (i, 0, 0)),
    )

    out = pl.pallas_call(
        ssa_kernel,
        out_shape=jax.ShapeDtypeStruct((bp, n, d), out_dtype),
        grid_spec=grid_spec,
        compiler_params=pltpu.CompilerParams(
            dimension_semantics=("parallel",)),
    )(x_in, wi_row, wkv, bkv, wo, bo)

    return out[:b] if bp != b else out


def init_params(key, d_model):
    """nn.Linear init from the module: weight ~ N(0, 0.001), bias = 0.
    Weights stored transposed: (in_features, out_features)."""
    ks = jax.random.split(key, 4)
    std = 0.001
    return {
        "wi": std * jax.random.normal(ks[0], (d_model, 1), jnp.float32),
        "bi": jnp.zeros((1, 1), jnp.float32),
        "wk": std * jax.random.normal(ks[1], (d_model, d_model), jnp.float32),
        "bk": jnp.zeros((1, d_model), jnp.float32),
        "wv": std * jax.random.normal(ks[2], (d_model, d_model), jnp.float32),
        "bv": jnp.zeros((1, d_model), jnp.float32),
        "wo": std * jax.random.normal(ks[3], (d_model, d_model), jnp.float32),
        "bo": jnp.zeros((1, d_model), jnp.float32),
    }


def ssa_reference(x, p):
    """Pure-JAX f32 reference mirroring the PyTorch forward."""
    i = x @ p["wi"] + p["bi"]                          # (b, n, 1)
    w = jax.nn.softmax(i, axis=1)
    ctx = jnp.sum(w * (x @ p["wk"] + p["bk"]), axis=1, keepdims=True)
    v = (x @ p["wv"] + p["bv"]) * ctx
    return v @ p["wo"] + p["bo"]


if __name__ == "__main__":
    key = jax.random.PRNGKey(0)
    kx, kp = jax.random.split(key)

    b, n, d = 2, 8, 32
    x = jax.random.normal(kx, (b, n, d), jnp.float32)
    params = init_params(kp, d)

    out = ssa_forward(x, params)
    out = jax.block_until_ready(out)

    ref = ssa_reference(x, params)
    assert out.shape == (b, n, d)

    # Matmul operands are bf16 (f32 accumulation), so compare with a
    # scale-normalized error rather than a tight absolute tolerance.
    rel_err = jnp.max(jnp.abs(out - ref)) / (jnp.max(jnp.abs(ref)) + 1e-12)
    assert float(rel_err) < 0.1, f"mismatch vs reference: rel_err={rel_err}"

    print("KERNEL_OK")
</pallas_src>

<mosaic_0001>
module attributes {stable_mosaic.version = 11 : i64} {
  func.func @ssa_kernel(%arg0: i32, %arg1: memref<2x8x32xbf16, #tpu.memory_space<vmem>>, %arg2: memref<1x32xf32, #tpu.memory_space<vmem>>, %arg3: memref<32x64xbf16, #tpu.memory_space<vmem>>, %arg4: memref<1x64xf32, #tpu.memory_space<vmem>>, %arg5: memref<32x32xbf16, #tpu.memory_space<vmem>>, %arg6: memref<1x32xf32, #tpu.memory_space<vmem>>, %arg7: memref<2x8x32xf32, #tpu.memory_space<vmem>>) attributes {dimension_semantics = [#tpu.dimension_semantics<parallel>], iteration_bounds = array<i64: 1>, scalar_prefetch = 0 : i64, scratch_operands = 0 : i64, tpu.core_type = #tpu.core_type<tc>, window_params = [{transform_indices = @transform_0, window_bounds = array<i64: 2, 8, 32>}, {pipeline_mode = #tpu.pipeline_mode<synchronous>, transform_indices = @transform_1, window_bounds = array<i64: 1, 32>}, {pipeline_mode = #tpu.pipeline_mode<synchronous>, transform_indices = @transform_2, window_bounds = array<i64: 32, 64>}, {pipeline_mode = #tpu.pipeline_mode<synchronous>, transform_indices = @transform_3, window_bounds = array<i64: 1, 64>}, {pipeline_mode = #tpu.pipeline_mode<synchronous>, transform_indices = @transform_4, window_bounds = array<i64: 32, 32>}, {pipeline_mode = #tpu.pipeline_mode<synchronous>, transform_indices = @transform_5, window_bounds = array<i64: 1, 32>}, {transform_indices = @transform_6, window_bounds = array<i64: 2, 8, 32>}]} {
    %c0 = arith.constant 0 : index
    %c0_0 = arith.constant 0 : index
    %c0_1 = arith.constant 0 : index
    %0 = vector.load %arg1[%c0, %c0_0, %c0_1] : memref<2x8x32xbf16, #tpu.memory_space<vmem>>, vector<2x8x32xbf16>
    %1 = vector.shape_cast %0 : vector<2x8x32xbf16> to vector<16x32xbf16>
    %2 = arith.extf %1 : vector<16x32xbf16> to vector<16x32xf32>
    %c0_2 = arith.constant 0 : index
    %c0_3 = arith.constant 0 : index
    %3 = vector.load %arg2[%c0_2, %c0_3] : memref<1x32xf32, #tpu.memory_space<vmem>>, vector<1x32xf32>
    %4 = vector.broadcast %3 : vector<1x32xf32> to vector<16x32xf32>
    %5 = arith.mulf %2, %4 : vector<16x32xf32>
    %cst = arith.constant dense<0.000000e+00> : vector<16xf32>
    %6 = vector.multi_reduction <add>, %5, %cst [1] : vector<16x32xf32> to vector<16xf32>
    %7 = vector.shape_cast %6 : vector<16xf32> to vector<16x1xf32>
    %c0_4 = arith.constant 0 : index
    %c0_5 = arith.constant 0 : index
    %8 = vector.load %arg3[%c0_4, %c0_5] : memref<32x64xbf16, #tpu.memory_space<vmem>>, vector<32x64xbf16>
    %cst_6 = arith.constant dense<0.000000e+00> : vector<16x64xf32>
    %9 = tpu.matmul %1, %8, %cst_6 {dimension_numbers = #tpu.dot_dimension_numbers<[1], [0], [0], [1], [0, 0, 1, 1], [], []>} : vector<16x32xbf16>, vector<32x64xbf16>, vector<16x64xf32> -> vector<16x64xf32>
    %c0_7 = arith.constant 0 : index
    %c0_8 = arith.constant 0 : index
    %10 = vector.load %arg4[%c0_7, %c0_8] : memref<1x64xf32, #tpu.memory_space<vmem>>, vector<1x64xf32>
    %11 = vector.broadcast %10 : vector<1x64xf32> to vector<16x64xf32>
    %12 = arith.addf %9, %11 : vector<16x64xf32>
    %13 = vector.extract_strided_slice %12 {offsets = [0, 0], sizes = [16, 32], strides = [1, 1]} : vector<16x64xf32> to vector<16x32xf32>
    %14 = vector.shape_cast %13 : vector<16x32xf32> to vector<2x8x32xf32>
    %15 = vector.extract_strided_slice %12 {offsets = [0, 32], sizes = [16, 32], strides = [1, 1]} : vector<16x64xf32> to vector<16x32xf32>
    %16 = vector.shape_cast %15 : vector<16x32xf32> to vector<2x8x32xf32>
    %17 = vector.shape_cast %7 : vector<16x1xf32> to vector<2x8x1xf32>
    %cst_9 = arith.constant dense<0xFF800000> : vector<2x1xf32>
    %18 = vector.multi_reduction <maximumf>, %17, %cst_9 [1] : vector<2x8x1xf32> to vector<2x1xf32>
    %19 = vector.shape_cast %18 : vector<2x1xf32> to vector<2x1x1xf32>
    %20 = vector.broadcast %19 : vector<2x1x1xf32> to vector<2x8x1xf32>
    %21 = arith.subf %17, %20 : vector<2x8x1xf32>
    %22 = math.exp %21 : vector<2x8x1xf32>
    %cst_10 = arith.constant dense<0.000000e+00> : vector<2x1xf32>
    %23 = vector.multi_reduction <add>, %22, %cst_10 [1] : vector<2x8x1xf32> to vector<2x1xf32>
    %24 = vector.shape_cast %23 : vector<2x1xf32> to vector<2x1x1xf32>
    %25 = tpu.reciprocal %24 {approx = true} : vector<2x1x1xf32> -> vector<2x1x1xf32>
    %26 = vector.broadcast %25 : vector<2x1x1xf32> to vector<2x8x1xf32>
    %27 = arith.mulf %22, %26 : vector<2x8x1xf32>
    %28 = vector.broadcast %27 : vector<2x8x1xf32> to vector<2x8x32xf32>
    %29 = arith.mulf %28, %14 : vector<2x8x32xf32>
    %cst_11 = arith.constant dense<0.000000e+00> : vector<2x32xf32>
    %30 = vector.multi_reduction <add>, %29, %cst_11 [1] : vector<2x8x32xf32> to vector<2x32xf32>
    %31 = vector.shape_cast %30 : vector<2x32xf32> to vector<2x1x32xf32>
    %32 = vector.broadcast %31 : vector<2x1x32xf32> to vector<2x8x32xf32>
    %33 = arith.mulf %16, %32 : vector<2x8x32xf32>
    %34 = vector.shape_cast %33 : vector<2x8x32xf32> to vector<16x32xf32>
    %35 = arith.truncf %34 : vector<16x32xf32> to vector<16x32xbf16>
    %c0_12 = arith.constant 0 : index
    %c0_13 = arith.constant 0 : index
    %36 = vector.load %arg5[%c0_12, %c0_13] : memref<32x32xbf16, #tpu.memory_space<vmem>>, vector<32x32xbf16>
    %cst_14 = arith.constant dense<0.000000e+00> : vector<16x32xf32>
    %37 = tpu.matmul %35, %36, %cst_14 {dimension_numbers = #tpu.dot_dimension_numbers<[1], [0], [0], [1], [0, 0, 1, 1], [], []>} : vector<16x32xbf16>, vector<32x32xbf16>, vector<16x32xf32> -> vector<16x32xf32>
    %c0_15 = arith.constant 0 : index
    %c0_16 = arith.constant 0 : index
    %38 = vector.load %arg6[%c0_15, %c0_16] : memref<1x32xf32, #tpu.memory_space<vmem>>, vector<1x32xf32>
    %39 = vector.broadcast %38 : vector<1x32xf32> to vector<16x32xf32>
    %40 = arith.addf %37, %39 : vector<16x32xf32>
    %41 = vector.shape_cast %40 : vector<16x32xf32> to vector<2x8x32xf32>
    %c0_17 = arith.constant 0 : index
    %c0_18 = arith.constant 0 : index
    %c0_19 = arith.constant 0 : index
    %42 = vector.load %arg7[%c0_17, %c0_18, %c0_19] : memref<2x8x32xf32, #tpu.memory_space<vmem>>, vector<2x8x32xf32>
    tpu.vector_store %arg7[%c0_17, %c0_18, %c0_19], %41 {strides = array<i32>} : memref<2x8x32xf32, #tpu.memory_space<vmem>>, vector<2x8x32xf32>,
    return
  }
  func.func @transform_0(%arg0: i32) -> (i32, i32, i32) {
    %c0_i32 = arith.constant 0 : i32
    %c0_i32_0 = arith.constant 0 : i32
    %c0_i32_1 = arith.constant 0 : i32
    return %arg0, %c0_i32, %c0_i32_0 : i32, i32, i32
  }
  func.func @transform_1(%arg0: i32) -> (i32, i32) {
    %c0_i32 = arith.constant 0 : i32
    %c0_i32_0 = arith.constant 0 : i32
    %c0_i32_1 = arith.constant 0 : i32
    return %c0_i32, %c0_i32_0 : i32, i32
  }
  func.func @transform_2(%arg0: i32) -> (i32, i32) {
    %c0_i32 = arith.constant 0 : i32
    %c0_i32_0 = arith.constant 0 : i32
    %c0_i32_1 = arith.constant 0 : i32
    return %c0_i32, %c0_i32_0 : i32, i32
  }
  func.func @transform_3(%arg0: i32) -> (i32, i32) {
    %c0_i32 = arith.constant 0 : i32
    %c0_i32_0 = arith.constant 0 : i32
    %c0_i32_1 = arith.constant 0 : i32
    return %c0_i32, %c0_i32_0 : i32, i32
  }
  func.func @transform_4(%arg0: i32) -> (i32, i32) {
    %c0_i32 = arith.constant 0 : i32
    %c0_i32_0 = arith.constant 0 : i32
    %c0_i32_1 = arith.constant 0 : i32
    return %c0_i32, %c0_i32_0 : i32, i32
  }
  func.func @transform_5(%arg0: i32) -> (i32, i32) {
    %c0_i32 = arith.constant 0 : i32
    %c0_i32_0 = arith.constant 0 : i32
    %c0_i32_1 = arith.constant 0 : i32
    return %c0_i32, %c0_i32_0 : i32, i32
  }
  func.func @transform_6(%arg0: i32) -> (i32, i32, i32) {
    %c0_i32 = arith.constant 0 : i32
    %c0_i32_0 = arith.constant 0 : i32
    %c0_i32_1 = arith.constant 0 : i32
    return %arg0, %c0_i32, %c0_i32_0 : i32, i32, i32
  }
}

</mosaic_0001>

<llo_original>
// kernel: tpu_custom_call.1
$region0: #{tpu_custom_call.1}
  #allocation0 [shape = 'u32[]', space=smem, size = 0x4, offset = 0x4, fixed_abs, tag = 'smem constant byte address 0x4 - core index']
  #allocation1 [shape = 'u32[144,128]{1,0:T(1,128)}', space=vmem, size = 0x12000, scoped, tag = 'internal scratch']
  %s0 = inlined_call_operand.hbm [shape: bf16[2,8,32], index: 0, kind: input, shape index: {}]
  %s1 = inlined_call_operand.vmem [shape: f32[1,32], index: 1, kind: input, shape index: {}]
  %s2 = inlined_call_operand.hbm [shape: bf16[32,64], index: 2, kind: input, shape index: {}]
  %s3 = inlined_call_operand.vmem [shape: f32[1,64], index: 3, kind: input, shape index: {}]
  %s4 = inlined_call_operand.hbm [shape: bf16[32,32], index: 4, kind: input, shape index: {}]
  %s5 = inlined_call_operand.vmem [shape: f32[1,32], index: 5, kind: input, shape index: {}]
  %s6 = inlined_call_operand.hbm [shape: f32[2,8,32], index: 6, kind: output, shape index: {}]
  %s7 = sld [smem:[#allocation0]]
  $region46: #{tpu_custom_call.1} parent=0
    _
  %s9 = ssub.s32 1, %s7
  %s10 = scalar_select 0, %s9, %s7
  $region1: #{tpu_custom_call.1} parent=0
    #allocation2 [shape = 'u8[4096]{0}', space=vmem, size = 0x1000, scoped, tag = 'input window, operand 0, single buffered']
    #allocation3 [shape = 's32[1]{0}', space=sflag, size = 0x4, scoped, tag = 'scoped memory for tpu_custom_call.1']
    #allocation4 [shape = 's32[1]{0}', space=sflag, size = 0x4, scoped, tag = 'scoped memory for tpu_custom_call.1']
    #allocation5 [shape = 'u8[8192]{0}', space=vmem, size = 0x2000, scoped, tag = 'input window, operand 2, single buffered']
    #allocation6 [shape = 's32[1]{0}', space=sflag, size = 0x4, scoped, tag = 'scoped memory for tpu_custom_call.1']
    #allocation7 [shape = 'u8[8192]{0}', space=vmem, size = 0x2000, scoped, tag = 'input window, operand 4, single buffered']
    #allocation8 [shape = 'u8[8192]{0}', space=vmem, size = 0x2000, scoped, tag = 'output window, operand 0, single buffered']
    %11 = vsyncpa [#allocation3], 0
    %12 = vsyncpa [#allocation6], 0
    %13 = vsyncpa [#allocation4], 0
    // Predicated region
    $region2: #{tpu_custom_call.1} parent=1 // pred_check
      _
    $region3: #{tpu_custom_call.1} parent=1 // pred_check_branch
      %15 = sbr.rel (0) target = $region5
    $region4: #{tpu_custom_call.1} parent=1 // pred_region
      %s17 = ssub.s32 128, 128
      %18 = vsyncadd [#allocation3], %s17
      %s19 = sshll.u32 [#allocation2], 4
      %s20 = int_to_ptr.vmem [resolvable:$true] %s19
      %25 = dma.hbm_to_vmem [thread:$0]  %s0, 128, %s20, [#allocation3], 64, 64, 4
    $region5: #{tpu_custom_call.1} parent=1 // pred_fallthru
      _
    // Predicated region
    $region6: #{tpu_custom_call.1} parent=1 // pred_check
      _
    $region7: #{tpu_custom_call.1} parent=1 // pred_check_branch
      %27 = sbr.rel (0) target = $region9
    $region8: #{tpu_custom_call.1} parent=1 // pred_region
      _
    $region9: #{tpu_custom_call.1} parent=1 // pred_fallthru
      _
    // Predicated region
    $region10: #{tpu_custom_call.1} parent=1 // pred_check
      _
    $region11: #{tpu_custom_call.1} parent=1 // pred_check_branch
      %29 = sbr.rel (0) target = $region13
    $region12: #{tpu_custom_call.1} parent=1 // pred_region
      %s31 = ssub.s32 256, 256
      %32 = vsyncadd [#allocation6], %s31
      %s33 = sshll.u32 [#allocation5], 4
      %s34 = int_to_ptr.vmem [resolvable:$true] %s33
      %39 = dma.hbm_to_vmem [thread:$0]  %s2, 256, %s34, [#allocation6], 64, 64, 4
    $region13: #{tpu_custom_call.1} parent=1 // pred_fallthru
      _
    // Predicated region
    $region14: #{tpu_custom_call.1} parent=1 // pred_check
      _
    $region15: #{tpu_custom_call.1} parent=1 // pred_check_branch
      %41 = sbr.rel (0) target = $region17
    $region16: #{tpu_custom_call.1} parent=1 // pred_region
      _
    $region17: #{tpu_custom_call.1} parent=1 // pred_fallthru
      _
    // Predicated region
    $region18: #{tpu_custom_call.1} parent=1 // pred_check
      _
    $region19: #{tpu_custom_call.1} parent=1 // pred_check_branch
      %43 = sbr.rel (0) target = $region21
    $region20: #{tpu_custom_call.1} parent=1 // pred_region
      %s45 = ssub.s32 256, 256
      %46 = vsyncadd [#allocation6], %s45
      %s47 = sshll.u32 [#allocation7], 4
      %s48 = int_to_ptr.vmem [resolvable:$true] %s47
      %53 = dma.hbm_to_vmem [thread:$0]  %s4, 256, %s48, [#allocation6], 64, 64, 4
    $region21: #{tpu_custom_call.1} parent=1 // pred_fallthru
      _
    // Predicated region
    $region22: #{tpu_custom_call.1} parent=1 // pred_check
      _
    $region23: #{tpu_custom_call.1} parent=1 // pred_check_branch
      %55 = sbr.rel (0) target = $region25
    $region24: #{tpu_custom_call.1} parent=1 // pred_region
      _
    $region25: #{tpu_custom_call.1} parent=1 // pred_fallthru
      _
    // Predicated region
    $region26: #{tpu_custom_call.1} parent=1 // pred_check
      _
    $region27: #{tpu_custom_call.1} parent=1 // pred_check_branch
      %57 = sbr.rel (0) target = $region29
    $region28: #{tpu_custom_call.1} parent=1 // pred_region
      %58 = dma.done [#allocation3], 128
    $region29: #{tpu_custom_call.1} parent=1 // pred_fallthru
      _
    // Predicated region
    $region30: #{tpu_custom_call.1} parent=1 // pred_check
      _
    $region31: #{tpu_custom_call.1} parent=1 // pred_check_branch
      %60 = sbr.rel (0) target = $region33
    $region32: #{tpu_custom_call.1} parent=1 // pred_region
      %61 = dma.done [#allocation6], 256
    $region33: #{tpu_custom_call.1} parent=1 // pred_fallthru
      _
    // Predicated region
    $region34: #{tpu_custom_call.1} parent=1 // pred_check
      _
    $region35: #{tpu_custom_call.1} parent=1 // pred_check_branch
      %63 = sbr.rel (0) target = $region37
    $region36: #{tpu_custom_call.1} parent=1 // pred_region
      %64 = dma.done [#allocation6], 256
    $region37: #{tpu_custom_call.1} parent=1 // pred_fallthru
      _
    %v66 = vld [vmem:[#allocation2] sm:$0xf]
    %v67 = vld [vmem:[#allocation2 + $0x4] sm:$0xf]
    %v68 = vunpack.c.l.bf16 %v66
    %v69 = vunpack.c.l.bf16 %v67
    %v70 = vld [vmem:[%s1] sm:$0x1]
    %v72 = vlaneseq
    %v73 = vshrl.u32 %v72, 7
    %v74 = vsub.s32 0, %v73
    %v75 = vrot.slane %v70, %v74
    %v77 = vmul.f32 %v68, %v75
    %v78 = vmul.f32 %v69, %v75
    %vm79 = vcmask 261120
    %v80 = vsel %vm79, %v77, 0.0
    %81 = vadd.xlane.f32.xlu0 %v80
    %v82 = vpop.xlane.xlu0 %81
    %v83 = vsel %vm79, %v78, 0.0
    %84 = vadd.xlane.f32.xlu0 %v83
    %v85 = vpop.xlane.xlu0 %84
    %v86 = vld [vmem:[#allocation5] sm:$0xf]
    %v87 = vld [vmem:[#allocation5 + $0x4] sm:$0xf]
    %v88 = vld [vmem:[#allocation5 + $0x8] sm:$0xf]
    %v89 = vld [vmem:[#allocation5 + $0xc] sm:$0xf]
    %v90 = vld [vmem:[%s3] sm:$0x1]
    %v92 = vlaneseq
    %v93 = vshrl.u32 %v92, 7
    %v94 = vsub.s32 0, %v93
    %v95 = vrot.slane %v90, %v94
    %v99 = vunpack.c.l.b16 %v66
    %v100 = vunpack.c.l.b16 %v67
    %v101 = vpack.c.b16 %v100, %v99
    %v106 = vunpack.c.l.b16 %v86
    %v107 = vunpack.c.l.b16 %v87
    %v108 = vunpack.c.l.b16 %v88
    %v109 = vunpack.c.l.b16 %v89
    %v110 = vpack.c.b16 %v107, %v106
    %v111 = vpack.c.b16 %v109, %v108
    %v115 = vsel %vm79, %v101, 0
    %117 = vmatprep.subr.bf16.mxu0 0
    %118 = vmatpush1.bf16.msra.mxu0 %v110
    %119 = vmatprep.subr.bf16.mxu0 0
    %120 = vmatpush1.bf16.msra.mxu0 %v111
    %121 = vmatprep.subr.bf16.mxu0 0
    %122 = vmatpush1.bf16.msra.mxu0 0
    %123 = vmatprep.subr.bf16.mxu0 0
    %124 = vmatpush1.bf16.msra.mxu0 0
    %125 = vmatprep.subr.bf16.mxu0 0
    %126 = vmatpush1.bf16.msra.mxu0 0
    %127 = vmatprep.subr.bf16.mxu0 0
    %128 = vmatpush1.bf16.msra.mxu0 0
    %129 = vmatprep.subr.bf16.mxu0 0
    %130 = vmatpush1.bf16.msra.mxu0 0
    %131 = vmatprep.subr.bf16.mxu0 0
    %132 = vmatpush1.bf16.msra.mxu0 0
    %133 = vmatprep.subr.bf16.mxu0 0
    %134 = vmatpush1.bf16.msra.mxu0 0
    %135 = vmatprep.subr.bf16.mxu0 0
    %136 = vmatpush1.bf16.msra.mxu0 0
    %137 = vmatprep.subr.bf16.mxu0 0
    %138 = vmatpush1.bf16.msra.mxu0 0
    %139 = vmatprep.subr.bf16.mxu0 0
    %140 = vmatpush1.bf16.msra.mxu0 0
    %141 = vmatprep.subr.bf16.mxu0 0
    %142 = vmatpush1.bf16.msra.mxu0 0
    %143 = vmatprep.subr.bf16.mxu0 0
    %144 = vmatpush1.bf16.msra.mxu0 0
    %145 = vmatprep.subr.bf16.mxu0 0
    %146 = vmatpush1.bf16.msra.mxu0 0
    %147 = vmatprep.subr.bf16.mxu0 0
    %148 = vmatpush1.bf16.msra.mxu0 0
    %149 = vmatprep.mubr.bf16.mxu0 0
    %150 = vmatmul.mubr.bf16.gmra.mrb[0].mxu0 %v115
    %v151 = vpop.f32.mrb[0].mxu0
    %v152 = vadd.f32 %v95, %v151
    %v153 = vpop.f32.mrb[0].mxu0
    %v154 = vpop.f32.mrb[0].mxu0
    %v155 = vadd.f32 %v95, %v154
    %v156 = vpop.f32.mrb[0].mxu0
    %157 = vdwg.mxu0
    %v158 = vrot.slane %v82, 4
    %v159 = vmax.f32 %v82, %v158
    %v160 = vrot.slane %v159, 2
    %v161 = vmax.f32 %v159, %v160
    %v162 = vrot.slane %v161, 1
    %v163 = vmax.f32 %v161, %v162
    %v164 = vrot.slane %v85, 4
    %v165 = vmax.f32 %v85, %v164
    %v166 = vrot.slane %v165, 2
    %v167 = vmax.f32 %v165, %v166
    %v168 = vrot.slane %v167, 1
    %v169 = vmax.f32 %v167, %v168
    %v170 = vsub.f32 %v82, %v163
    %v171 = vsub.f32 %v85, %v169
    %v172 = vmul.f32 %v170, 1.442695
    %v173 = vpow.pop %v172
    %v174 = vmul.f32 %v171, 1.442695
    %v175 = vpow.pop %v174
    %v176 = vrot.slane %v173, 4
    %v177 = vadd.f32 %v173, %v176
    %v178 = vrot.slane %v177, 2
    %v179 = vadd.f32 %v177, %v178
    %v180 = vrot.slane %v179, 1
    %v181 = vadd.f32 %v179, %v180
    %v182 = vrot.slane %v175, 4
    %v183 = vadd.f32 %v175, %v182
    %v184 = vrot.slane %v183, 2
    %v185 = vadd.f32 %v183, %v184
    %v186 = vrot.slane %v185, 1
    %v187 = vadd.f32 %v185, %v186
    %v188 = vrcp.pop %v181
    %v189 = vrcp.pop %v187
    %v190 = vmul.f32 %v173, %v188
    %v191 = vmul.f32 %v175, %v189
    %v192 = vmul.f32 %v190, %v152
    %v193 = vmul.f32 %v191, %v155
    %v194 = vsel %vm79, %v192, 0.0
    %v195 = vrot.slane %v194, 4
    %v196 = vadd.f32 %v194, %v195
    %v197 = vrot.slane %v196, 2
    %v198 = vadd.f32 %v196, %v197
    %v199 = vrot.slane %v198, 1
    %v200 = vadd.f32 %v198, %v199
    %v201 = vsel %vm79, %v193, 0.0
    %v202 = vrot.slane %v201, 4
    %v203 = vadd.f32 %v201, %v202
    %v204 = vrot.slane %v203, 2
    %v205 = vadd.f32 %v203, %v204
    %v206 = vrot.slane %v205, 1
    %v207 = vadd.f32 %v205, %v206
    %210 = vrot.lane.b32.xlu0 %v200, 32
    %v211 = vpop.permute.xlu0 %210
    %212 = vrot.lane.b32.xlu0 %v207, 32
    %v213 = vpop.permute.xlu0 %212
    %v216 = vmul.f32 %v152, %v211
    %v217 = vmul.f32 %v155, %v213
    %v218 = vpack.c.bf16 %v217, %v216
    %v219 = vld [vmem:[#allocation7] sm:$0xf]
    %v220 = vld [vmem:[#allocation7 + $0x4] sm:$0xf]
    %v221 = vld [vmem:[#allocation7 + $0x8] sm:$0xf]
    %v222 = vld [vmem:[#allocation7 + $0xc] sm:$0xf]
    %v223 = vld [vmem:[%s5] sm:$0x1]
    %v225 = vlaneseq
    %v226 = vshrl.u32 %v225, 7
    %v227 = vsub.s32 0, %v226
    %v228 = vrot.slane %v223, %v227
    %231 = vrot.lane.b32.xlu0 %v218, 96
    %v232 = vpop.permute.xlu0 %231
    %v237 = vunpack.c.l.b16 %v219
    %v238 = vunpack.c.l.b16 %v220
    %v239 = vunpack.c.l.b16 %v221
    %v240 = vunpack.c.l.b16 %v222
    %v241 = vpack.c.b16 %v238, %v237
    %v242 = vpack.c.b16 %v240, %v239
    %v246 = vsel %vm79, %v232, 0
    %248 = vmatprep.subr.bf16.mxu0 0
    %249 = vmatpush1.bf16.msra.mxu0 %v241
    %250 = vmatprep.subr.bf16.mxu0 0
    %251 = vmatpush1.bf16.msra.mxu0 %v242
    %252 = vmatprep.subr.bf16.mxu0 0
    %253 = vmatpush1.bf16.msra.mxu0 0
    %254 = vmatprep.subr.bf16.mxu0 0
    %255 = vmatpush1.bf16.msra.mxu0 0
    %256 = vmatprep.subr.bf16.mxu0 0
    %257 = vmatpush1.bf16.msra.mxu0 0
    %258 = vmatprep.subr.bf16.mxu0 0
    %259 = vmatpush1.bf16.msra.mxu0 0
    %260 = vmatprep.subr.bf16.mxu0 0
    %261 = vmatpush1.bf16.msra.mxu0 0
    %262 = vmatprep.subr.bf16.mxu0 0
    %263 = vmatpush1.bf16.msra.mxu0 0
    %264 = vmatprep.subr.bf16.mxu0 0
    %265 = vmatpush1.bf16.msra.mxu0 0
    %266 = vmatprep.subr.bf16.mxu0 0
    %267 = vmatpush1.bf16.msra.mxu0 0
    %268 = vmatprep.subr.bf16.mxu0 0
    %269 = vmatpush1.bf16.msra.mxu0 0
    %270 = vmatprep.subr.bf16.mxu0 0
    %271 = vmatpush1.bf16.msra.mxu0 0
    %272 = vmatprep.subr.bf16.mxu0 0
    %273 = vmatpush1.bf16.msra.mxu0 0
    %274 = vmatprep.subr.bf16.mxu0 0
    %275 = vmatpush1.bf16.msra.mxu0 0
    %276 = vmatprep.subr.bf16.mxu0 0
    %277 = vmatpush1.bf16.msra.mxu0 0
    %278 = vmatprep.subr.bf16.mxu0 0
    %279 = vmatpush1.bf16.msra.mxu0 0
    %280 = vmatprep.mubr.bf16.mxu0 0
    %281 = vmatmul.mubr.bf16.gmra.mrb[0].mxu0 %v246
    %v282 = vpop.f32.mrb[0].mxu0
    %v283 = vadd.f32 %v228, %v282
    %v284 = vpop.f32.mrb[0].mxu0
    %v285 = vpop.f32.mrb[0].mxu0
    %v286 = vadd.f32 %v228, %v285
    %v287 = vpop.f32.mrb[0].mxu0
    %288 = vdwg.mxu0
    %289 = vst.msk [vmem:[#allocation8] sm:$0xff] %vm79, %v283
    %290 = vst.msk [vmem:[#allocation8 + $0x8] sm:$0xff] %vm79, %v286
    // Predicated region
    $region38: #{tpu_custom_call.1} parent=1 // pred_check
      _
    $region39: #{tpu_custom_call.1} parent=1 // pred_check_branch
      %292 = sbr.rel (0) target = $region41
    $region40: #{tpu_custom_call.1} parent=1 // pred_region
      %s294 = ssub.s32 256, 256
      %295 = vsyncadd [#allocation4], %s294
      %s296 = sshll.u32 [#allocation8], 4
      %s297 = int_to_ptr.vmem [resolvable:$true] %s296
      %302 = dma.vmem_to_hbm [thread:$0]  %s297, 256, %s6, [#allocation4], 128, 128, 8
    $region41: #{tpu_custom_call.1} parent=1 // pred_fallthru
      _
    // Predicated region
    $region42: #{tpu_custom_call.1} parent=1 // pred_check
      _
    $region43: #{tpu_custom_call.1} parent=1 // pred_check_branch
      %304 = sbr.rel (0) target = $region45
    $region44: #{tpu_custom_call.1} parent=1 // pred_region
      %305 = dma.done [#allocation4], 256
    $region45: #{tpu_custom_call.1} parent=1 // pred_fallthru
      _
    %306 = vsyncpa [#allocation3], 1
    %307 = vsyncpa [#allocation6], 1
    %308 = vsyncpa [#allocation4], 1

</llo_original>
